<compile_context>
chip_gen: v6e
topology: v6e:2x2x1
jax: 0.10.0
libtpu: 0.0.40
codegen_flags: <defaults>
</compile_context>

<pallas_src>
import functools

import jax
import jax.numpy as jnp
from jax import lax
from jax.experimental import pallas as pl
from jax.experimental.pallas import tpu as pltpu

N_CLASSES = 21
IGNORE_IDX = 255


def _ceil_to(x, m):
    return ((x + m - 1) // m) * m


def _cdiv(a, b):
    return -(-a // b)


@functools.lru_cache(maxsize=None)
def _tpu_generation_config():
    """Returns (tile_hw_max, num_splits, vmem_limit_bytes), generation-aware."""
    vmem = None
    try:
        vmem = int(pltpu.get_tpu_info().vmem_capacity_bytes)
    except Exception:
        vmem = None
    if vmem is not None:
        is_v7 = vmem <= 64 * 1024 * 1024
    else:
        try:
            kind = jax.devices()[0].device_kind.lower()
        except Exception:
            kind = ""
        is_v7 = "7" in kind
    if is_v7:
        # v7x: 64 MiB VMEM/TC, 2 TCs/chip; kernel is VPU/XLU/EUP-bound at
        # 3.2 TB/s HBM, so keep tiles moderate and leave VMEM headroom for
        # the in-kernel full-tile f32 temporaries.
        tile_hw_max, num_splits, limit = 8192, 2, 48 * 1024 * 1024
    else:
        # v5e / v6e: 128 MiB VMEM, single TensorCore, HBM-bandwidth-bound ->
        # big tiles to amortize per-step overhead, no split axis.
        tile_hw_max, num_splits, limit = 32768, 1, 96 * 1024 * 1024
    if vmem is not None:
        limit = min(limit, (vmem * 3) // 4)
    return tile_hw_max, num_splits, limit


def _ce_loss_kernel(num_inputs, hw, *args):
    """Cross-entropy-with-ignore on one (1, C, TILE_HW) tile, scratch-accumulated.

    args = (*logit_refs, tgt_ref, loss_out, cnt_out, loss_acc, cnt_acc)
      logit_refs[k]: (1, C, TILE_HW)  input dtype (cast to f32 in VMEM)
      tgt_ref:       (1, 1, TILE_HW)  int32
      loss_out/cnt_out: (1, 1, 1) f32, written once per split (last grid step)
      loss_acc/cnt_acc: (1, TILE_HW) f32 lane-vector VMEM accumulators
    """
    logit_refs = args[:num_inputs]
    tgt_ref = args[num_inputs]
    loss_out = args[num_inputs + 1]
    cnt_out = args[num_inputs + 2]
    loss_acc = args[num_inputs + 3]
    cnt_acc = args[num_inputs + 4]

    first = jnp.logical_and(pl.program_id(1) == 0, pl.program_id(2) == 0)

    @pl.when(first)
    def _():
        loss_acc[...] = jnp.zeros_like(loss_acc)
        cnt_acc[...] = jnp.zeros_like(cnt_acc)

    tile_hw = tgt_ref.shape[-1]
    c = logit_refs[0].shape[1]

    # Global pixel offset of this tile; masks both the ragged tail of the last
    # real tile (OOB garbage in the block) and any phantom tiles of the split.
    tile_idx = pl.program_id(0) * pl.num_programs(2) + pl.program_id(2)
    pix0 = tile_idx * tile_hw
    lane = lax.broadcasted_iota(jnp.int32, (1, tile_hw), 1)
    in_range = (pix0 + lane) < hw

    tgt = tgt_ref[0]                                    # (1, TILE_HW) int32
    valid = jnp.logical_and(in_range, tgt != IGNORE_IDX)

    # Loop-invariant one-hot mask (hoisted out of the per-input loop).
    cls_ids = lax.broadcasted_iota(jnp.int32, (c, tile_hw), 0)
    onehot = cls_ids == tgt                             # no match on ignore/garbage

    pix_loss = jnp.zeros((1, tile_hw), jnp.float32)
    for lref in logit_refs:
        x = lref[0].astype(jnp.float32)                 # (C, TILE_HW), class on sublane
        m = jnp.max(x, axis=0, keepdims=True)           # sublane reduce
        lse = jnp.log(jnp.sum(jnp.exp(x - m), axis=0, keepdims=True)) + m
        x_t = jnp.sum(jnp.where(onehot, x, 0.0), axis=0, keepdims=True)
        pix_loss = pix_loss + (lse - x_t)               # -log p_target, summed over inputs

    # Lane-vector accumulation (pure VPU adds); garbage/ignored lanes -> 0.
    loss_acc[...] += jnp.where(valid, pix_loss, 0.0)
    cnt_acc[...] += valid.astype(jnp.float32)

    last = jnp.logical_and(pl.program_id(1) == pl.num_programs(1) - 1,
                           pl.program_id(2) == pl.num_programs(2) - 1)

    @pl.when(last)
    def _():
        # Single cross-lane reduce per split, only in the epilogue.
        loss_out[0] = jnp.sum(loss_acc[...], axis=1, keepdims=True)
        cnt_out[0] = jnp.sum(cnt_acc[...], axis=1, keepdims=True)


@functools.partial(jax.jit,
                   static_argnames=("n_classes", "tile_hw_max", "num_splits"))
def _ce_loss_fused(logits_tuple, target, n_classes=N_CLASSES,
                   tile_hw_max=None, num_splits=None):
    """Sum over tuple members of CrossEntropyLoss(ignore_index=255, reduction='mean')."""
    num_inputs = len(logits_tuple)
    n, c, h, w = logits_tuple[0].shape
    assert c == n_classes
    hw = h * w

    cfg_tile, cfg_splits, vmem_limit = _tpu_generation_config()
    if tile_hw_max is None:
        tile_hw_max = cfg_tile
    if num_splits is None:
        num_splits = cfg_splits

    tile_hw = min(tile_hw_max, _ceil_to(hw, 128))
    total_tiles = _cdiv(hw, tile_hw)
    num_splits = max(1, min(num_splits, total_tiles))
    tiles_per_split = _cdiv(total_tiles, num_splits)

    # NCHW -> (N, C, H*W): a free view of the contiguous layout.  No padding,
    # no wrapper dtype cast of the logits -- the f32 upcast happens per-tile in
    # VMEM and the ragged tail is masked in-kernel.
    logits = [x.reshape(n, c, hw) for x in logits_tuple]
    tgt = target.reshape(n, 1, hw).astype(jnp.int32)   # no-op for int32 targets

    if total_tiles % num_splits == 0:
        def tile_of(s, t):
            return s * tiles_per_split + t
    else:
        def tile_of(s, t):
            # Clamp phantom tiles of the last split (their lanes are fully
            # masked in-kernel via the pixel-index iota).
            return jnp.minimum(s * tiles_per_split + t, total_tiles - 1)

    logit_spec = pl.BlockSpec((1, c, tile_hw), lambda s, b, t: (b, 0, tile_of(s, t)))
    tgt_spec = pl.BlockSpec((1, 1, tile_hw), lambda s, b, t: (b, 0, tile_of(s, t)))
    out_spec = pl.BlockSpec((1, 1, 1), lambda s, b, t: (s, 0, 0))

    loss_sums, cnts = pl.pallas_call(
        functools.partial(_ce_loss_kernel, num_inputs, hw),
        out_shape=(jax.ShapeDtypeStruct((num_splits, 1, 1), jnp.float32),
                   jax.ShapeDtypeStruct((num_splits, 1, 1), jnp.float32)),
        grid_spec=pltpu.PrefetchScalarGridSpec(
            num_scalar_prefetch=0,
            grid=(num_splits, n, tiles_per_split),
            in_specs=[logit_spec] * num_inputs + [tgt_spec],
            out_specs=(out_spec, out_spec),
            scratch_shapes=[pltpu.VMEM((1, tile_hw), jnp.float32),
                            pltpu.VMEM((1, tile_hw), jnp.float32)]),
        compiler_params=pltpu.CompilerParams(
            dimension_semantics=("parallel", "arbitrary", "arbitrary"),
            vmem_limit_bytes=vmem_limit),
    )(*logits, tgt)

    # loss_i = sum_i / cnt  ->  sum over tuple members = (sum_1 + sum_2) / cnt.
    return (jnp.sum(loss_sums) / jnp.sum(cnts)).astype(jnp.float32)


def segmentation_loss(inputs, target, n_classes=N_CLASSES):
    """Mirrors SegmentationLoss.forward for loss_type='ce' (class_wts=None)."""
    if isinstance(inputs, tuple):
        assert len(inputs) == 2
        return _ce_loss_fused(inputs, target, n_classes=n_classes)
    return _ce_loss_fused((inputs,), target, n_classes=n_classes)


def _reference_ce(logits_nchw, target_nhw):
    """Pure-JAX reference of CrossEntropyLoss(ignore_index=255, reduction='mean')."""
    n, c, h, w = logits_nchw.shape
    x = jnp.transpose(logits_nchw, (0, 2, 3, 1)).reshape(-1, c).astype(jnp.float32)
    t = target_nhw.reshape(-1).astype(jnp.int32)
    logp = jax.nn.log_softmax(x, axis=-1)
    valid = t != IGNORE_IDX
    t_safe = jnp.where(valid, t, 0)
    picked = jnp.take_along_axis(logp, t_safe[:, None], axis=-1)[:, 0]
    loss = jnp.where(valid, -picked, 0.0)
    return jnp.sum(loss) / jnp.sum(valid.astype(jnp.float32))


if __name__ == "__main__":
    key = jax.random.PRNGKey(0)
    ks = jax.random.split(key, 12)
    batch, n_classes = 2, N_CLASSES

    def make_case(k0, k1, k2, k3, h, w):
        lg1 = jax.random.normal(k0, (batch, n_classes, h, w), dtype=jnp.float32)
        lg2 = jax.random.normal(k1, (batch, n_classes, h, w), dtype=jnp.float32)
        tgt = jax.random.randint(k2, (batch, h, w), 0, n_classes, dtype=jnp.int32)
        mask = jax.random.bernoulli(k3, 0.1, (batch, h, w))
        tgt = jnp.where(mask, IGNORE_IDX, tgt)
        return lg1, lg2, tgt

    # Case 1: 16x16 spatial -- single-tensor and tuple (summed) paths.
    lg1, lg2, tgt = make_case(ks[0], ks[1], ks[2], ks[3], 16, 16)
    loss = jax.block_until_ready(segmentation_loss(lg1, tgt))
    ref = _reference_ce(lg1, tgt)
    assert jnp.allclose(loss, ref, rtol=1e-5, atol=1e-5), (loss, ref)

    loss_t = jax.block_until_ready(segmentation_loss((lg1, lg2), tgt))
    ref_t = _reference_ce(lg1, tgt) + _reference_ce(lg2, tgt)
    assert jnp.allclose(loss_t, ref_t, rtol=1e-5, atol=1e-5), (loss_t, ref_t)

    # Case 2: ragged spatial size (10x13 = 130 pixels) with a forced small tile:
    # exercises in-kernel tail masking (no wrapper padding of the logits).
    lg1r, lg2r, tgtr = make_case(ks[4], ks[5], ks[6], ks[7], 10, 13)
    loss_r = jax.block_until_ready(
        _ce_loss_fused((lg1r, lg2r), tgtr, n_classes=n_classes, tile_hw_max=128))
    ref_r = _reference_ce(lg1r, tgtr) + _reference_ce(lg2r, tgtr)
    assert jnp.allclose(loss_r, ref_r, rtol=1e-5, atol=1e-5), (loss_r, ref_r)

    # Case 3: forced 2-way split over 3 tiles (phantom-tile clamping path).
    lg1s, _, tgts = make_case(ks[8], ks[9], ks[10], ks[11], 16, 24)
    loss_s = jax.block_until_ready(
        _ce_loss_fused((lg1s,), tgts, n_classes=n_classes,
                       tile_hw_max=128, num_splits=2))
    ref_s = _reference_ce(lg1s, tgts)
    assert jnp.allclose(loss_s, ref_s, rtol=1e-5, atol=1e-5), (loss_s, ref_s)

    print("KERNEL_OK")
</pallas_src>

<mosaic_0001>
module attributes {stable_mosaic.version = 11 : i64} {
  func.func @_ce_loss_kernel(%arg0: i32, %arg1: i32, %arg2: i32, %arg3: memref<1x21x256xf32, #tpu.memory_space<vmem>>, %arg4: memref<1x1x256xi32, #tpu.memory_space<vmem>>, %arg5: memref<1x1x1xf32, #tpu.memory_space<vmem>>, %arg6: memref<1x1x1xf32, #tpu.memory_space<vmem>>, %arg7: memref<1x256xf32, #tpu.memory_space<vmem>>, %arg8: memref<1x256xf32, #tpu.memory_space<vmem>>) attributes {dimension_semantics = [#tpu.dimension_semantics<parallel>, #tpu.dimension_semantics<arbitrary>, #tpu.dimension_semantics<arbitrary>], iteration_bounds = array<i64: 1, 2, 1>, scalar_prefetch = 0 : i64, scratch_operands = 2 : i64, tpu.core_type = #tpu.core_type<tc>, window_params = [{transform_indices = @transform_0, window_bounds = array<i64: 1, 21, 256>}, {transform_indices = @transform_1, window_bounds = array<i64: 1, 1, 256>}, {transform_indices = @transform_2, window_bounds = array<i64: 1, 1, 1>}, {transform_indices = @transform_3, window_bounds = array<i64: 1, 1, 1>}]} {
    %c0_i32 = arith.constant 0 : i32
    %0 = arith.cmpi eq, %arg1, %c0_i32 : i32
    %c0_i32_0 = arith.constant 0 : i32
    %1 = arith.cmpi eq, %arg2, %c0_i32_0 : i32
    %2 = arith.andi %0, %1 : i1
    %3 = arith.extui %2 : i1 to i32
    %c0_i32_1 = arith.constant 0 : i32
    %4 = arith.cmpi ne, %3, %c0_i32_1 : i32
    scf.if %4 {
      %cst_24 = arith.constant 0.000000e+00 : f32
      %54 = vector.broadcast %cst_24 : f32 to vector<1x256xf32>
      %c0_25 = arith.constant 0 : index
      %c0_26 = arith.constant 0 : index
      %55 = vector.load %arg7[%c0_25, %c0_26] : memref<1x256xf32, #tpu.memory_space<vmem>>, vector<1x256xf32>
      tpu.vector_store %arg7[%c0_25, %c0_26], %54 {strides = array<i32>} : memref<1x256xf32, #tpu.memory_space<vmem>>, vector<1x256xf32>,
      %cst_27 = arith.constant 0.000000e+00 : f32
      %56 = vector.broadcast %cst_27 : f32 to vector<1x256xf32>
      %c0_28 = arith.constant 0 : index
      %c0_29 = arith.constant 0 : index
      %57 = vector.load %arg8[%c0_28, %c0_29] : memref<1x256xf32, #tpu.memory_space<vmem>>, vector<1x256xf32>
      tpu.vector_store %arg8[%c0_28, %c0_29], %56 {strides = array<i32>} : memref<1x256xf32, #tpu.memory_space<vmem>>, vector<1x256xf32>,
    } else {
    }
    %c1_i32 = arith.constant 1 : i32
    %5 = arith.muli %arg0, %c1_i32 : i32
    %6 = arith.addi %5, %arg2 : i32
    %c256_i32 = arith.constant 256 : i32
    %7 = arith.muli %6, %c256_i32 : i32
    %8 = tpu.iota {dimensions = array<i32: 1>} : vector<1x256xi32>
    %9 = vector.broadcast %7 : i32 to vector<1x256xi32>
    %10 = arith.addi %9, %8 : vector<1x256xi32>
    %c256_i32_2 = arith.constant 256 : i32
    %11 = vector.broadcast %c256_i32_2 : i32 to vector<1x256xi32>
    %12 = arith.cmpi slt, %10, %11 : vector<1x256xi32>
    %c0 = arith.constant 0 : index
    %c0_3 = arith.constant 0 : index
    %c0_4 = arith.constant 0 : index
    %13 = vector.load %arg4[%c0, %c0_3, %c0_4] : memref<1x1x256xi32, #tpu.memory_space<vmem>>, vector<1x1x256xi32>
    %14 = vector.shape_cast %13 : vector<1x1x256xi32> to vector<1x256xi32>
    %c255_i32 = arith.constant 255 : i32
    %15 = vector.broadcast %c255_i32 : i32 to vector<1x256xi32>
    %16 = arith.cmpi ne, %14, %15 : vector<1x256xi32>
    %17 = arith.andi %12, %16 : vector<1x256xi1>
    %18 = tpu.iota {dimensions = array<i32: 0>} : vector<21x256xi32>
    %19 = vector.broadcast %14 : vector<1x256xi32> to vector<21x256xi32>
    %20 = arith.cmpi eq, %18, %19 : vector<21x256xi32>
    %cst = arith.constant 0.000000e+00 : f32
    %21 = vector.broadcast %cst : f32 to vector<1x256xf32>
    %c0_5 = arith.constant 0 : index
    %c0_6 = arith.constant 0 : index
    %c0_7 = arith.constant 0 : index
    %22 = vector.load %arg3[%c0_5, %c0_6, %c0_7] : memref<1x21x256xf32, #tpu.memory_space<vmem>>, vector<1x21x256xf32>
    %23 = vector.shape_cast %22 : vector<1x21x256xf32> to vector<21x256xf32>
    %cst_8 = arith.constant dense<0xFF800000> : vector<256xf32>
    %24 = vector.multi_reduction <maximumf>, %23, %cst_8 [0] : vector<21x256xf32> to vector<256xf32>
    %25 = vector.shape_cast %24 : vector<256xf32> to vector<1x256xf32>
    %26 = vector.broadcast %25 : vector<1x256xf32> to vector<21x256xf32>
    %27 = arith.subf %23, %26 : vector<21x256xf32>
    %28 = math.exp %27 : vector<21x256xf32>
    %cst_9 = arith.constant dense<0.000000e+00> : vector<256xf32>
    %29 = vector.multi_reduction <add>, %28, %cst_9 [0] : vector<21x256xf32> to vector<256xf32>
    %30 = vector.shape_cast %29 : vector<256xf32> to vector<1x256xf32>
    %31 = math.log %30 : vector<1x256xf32>
    %32 = arith.addf %31, %25 : vector<1x256xf32>
    %cst_10 = arith.constant 0.000000e+00 : f32
    %33 = vector.broadcast %cst_10 : f32 to vector<21x256xf32>
    %34 = arith.select %20, %23, %33 : vector<21x256xi1>, vector<21x256xf32>
    %cst_11 = arith.constant dense<0.000000e+00> : vector<256xf32>
    %35 = vector.multi_reduction <add>, %34, %cst_11 [0] : vector<21x256xf32> to vector<256xf32>
    %36 = vector.shape_cast %35 : vector<256xf32> to vector<1x256xf32>
    %37 = arith.subf %32, %36 : vector<1x256xf32>
    %38 = arith.addf %21, %37 : vector<1x256xf32>
    %c0_12 = arith.constant 0 : index
    %c0_13 = arith.constant 0 : index
    %39 = vector.load %arg7[%c0_12, %c0_13] : memref<1x256xf32, #tpu.memory_space<vmem>>, vector<1x256xf32>
    %cst_14 = arith.constant 0.000000e+00 : f32
    %40 = vector.broadcast %cst_14 : f32 to vector<1x256xf32>
    %41 = arith.select %17, %38, %40 : vector<1x256xi1>, vector<1x256xf32>
    %42 = arith.addf %39, %41 : vector<1x256xf32>
    %c0_15 = arith.constant 0 : index
    %c0_16 = arith.constant 0 : index
    %43 = vector.load %arg7[%c0_15, %c0_16] : memref<1x256xf32, #tpu.memory_space<vmem>>, vector<1x256xf32>
    tpu.vector_store %arg7[%c0_15, %c0_16], %42 {strides = array<i32>} : memref<1x256xf32, #tpu.memory_space<vmem>>, vector<1x256xf32>,
    %c0_17 = arith.constant 0 : index
    %c0_18 = arith.constant 0 : index
    %44 = vector.load %arg8[%c0_17, %c0_18] : memref<1x256xf32, #tpu.memory_space<vmem>>, vector<1x256xf32>
    %45 = arith.extui %17 : vector<1x256xi1> to vector<1x256xi32>
    %46 = arith.sitofp %45 : vector<1x256xi32> to vector<1x256xf32>
    %47 = arith.addf %44, %46 : vector<1x256xf32>
    %c0_19 = arith.constant 0 : index
    %c0_20 = arith.constant 0 : index
    %48 = vector.load %arg8[%c0_19, %c0_20] : memref<1x256xf32, #tpu.memory_space<vmem>>, vector<1x256xf32>
    tpu.vector_store %arg8[%c0_19, %c0_20], %47 {strides = array<i32>} : memref<1x256xf32, #tpu.memory_space<vmem>>, vector<1x256xf32>,
    %c1_i32_21 = arith.constant 1 : i32
    %49 = arith.cmpi eq, %arg1, %c1_i32_21 : i32
    %c0_i32_22 = arith.constant 0 : i32
    %50 = arith.cmpi eq, %arg2, %c0_i32_22 : i32
    %51 = arith.andi %49, %50 : i1
    %52 = arith.extui %51 : i1 to i32
    %c0_i32_23 = arith.constant 0 : i32
    %53 = arith.cmpi ne, %52, %c0_i32_23 : i32
    scf.if %53 {
      %c0_24 = arith.constant 0 : index
      %c0_25 = arith.constant 0 : index
      %54 = vector.load %arg7[%c0_24, %c0_25] : memref<1x256xf32, #tpu.memory_space<vmem>>, vector<1x256xf32>
      %cst_26 = arith.constant dense<0.000000e+00> : vector<1xf32>
      %55 = vector.multi_reduction <add>, %54, %cst_26 [1] : vector<1x256xf32> to vector<1xf32>
      %56 = vector.shape_cast %55 : vector<1xf32> to vector<1x1xf32>
      %c0_27 = arith.constant 0 : index
      %c0_28 = arith.constant 0 : index
      %c0_29 = arith.constant 0 : index
      %57 = vector.load %arg5[%c0_27, %c0_28, %c0_29] : memref<1x1x1xf32, #tpu.memory_space<vmem>>, vector<1x1x1xf32>
      %58 = vector.shape_cast %57 : vector<1x1x1xf32> to vector<1x1xf32>
      %59 = vector.shape_cast %56 : vector<1x1xf32> to vector<1x1x1xf32>
      tpu.vector_store %arg5[%c0_27, %c0_28, %c0_29], %59 {strides = array<i32>} : memref<1x1x1xf32, #tpu.memory_space<vmem>>, vector<1x1x1xf32>,
      %c0_30 = arith.constant 0 : index
      %c0_31 = arith.constant 0 : index
      %60 = vector.load %arg8[%c0_30, %c0_31] : memref<1x256xf32, #tpu.memory_space<vmem>>, vector<1x256xf32>
      %cst_32 = arith.constant dense<0.000000e+00> : vector<1xf32>
      %61 = vector.multi_reduction <add>, %60, %cst_32 [1] : vector<1x256xf32> to vector<1xf32>
      %62 = vector.shape_cast %61 : vector<1xf32> to vector<1x1xf32>
      %c0_33 = arith.constant 0 : index
      %c0_34 = arith.constant 0 : index
      %c0_35 = arith.constant 0 : index
      %63 = vector.load %arg6[%c0_33, %c0_34, %c0_35] : memref<1x1x1xf32, #tpu.memory_space<vmem>>, vector<1x1x1xf32>
      %64 = vector.shape_cast %63 : vector<1x1x1xf32> to vector<1x1xf32>
      %65 = vector.shape_cast %62 : vector<1x1xf32> to vector<1x1x1xf32>
      tpu.vector_store %arg6[%c0_33, %c0_34, %c0_35], %65 {strides = array<i32>} : memref<1x1x1xf32, #tpu.memory_space<vmem>>, vector<1x1x1xf32>,
    } else {
    }
    return
  }
  func.func @transform_0(%arg0: i32, %arg1: i32, %arg2: i32) -> (i32, i32, i32) {
    %c1_i32 = arith.constant 1 : i32
    %0 = arith.muli %arg0, %c1_i32 : i32
    %1 = arith.addi %0, %arg2 : i32
    %c0_i32 = arith.constant 0 : i32
    %c0_i32_0 = arith.constant 0 : i32
    return %arg1, %c0_i32, %1 : i32, i32, i32
  }
  func.func @transform_1(%arg0: i32, %arg1: i32, %arg2: i32) -> (i32, i32, i32) {
    %c1_i32 = arith.constant 1 : i32
    %0 = arith.muli %arg0, %c1_i32 : i32
    %1 = arith.addi %0, %arg2 : i32
    %c0_i32 = arith.constant 0 : i32
    %c0_i32_0 = arith.constant 0 : i32
    return %arg1, %c0_i32, %1 : i32, i32, i32
  }
  func.func @transform_2(%arg0: i32, %arg1: i32, %arg2: i32) -> (i32, i32, i32) {
    %c0_i32 = arith.constant 0 : i32
    %c0_i32_0 = arith.constant 0 : i32
    %c0_i32_1 = arith.constant 0 : i32
    return %arg0, %c0_i32, %c0_i32_0 : i32, i32, i32
  }
  func.func @transform_3(%arg0: i32, %arg1: i32, %arg2: i32) -> (i32, i32, i32) {
    %c0_i32 = arith.constant 0 : i32
    %c0_i32_0 = arith.constant 0 : i32
    %c0_i32_1 = arith.constant 0 : i32
    return %arg0, %c0_i32, %c0_i32_0 : i32, i32, i32
  }
}

</mosaic_0001>

<llo_original>
// kernel: _ce_loss_fused.1
$region0: #{_ce_loss_fused.1}
  #allocation0 [shape = 'u32[]', space=smem, size = 0x4, offset = 0x4, fixed_abs, tag = 'smem constant byte address 0x4 - core index']
  #allocation1 [shape = 'u32[144,128]{1,0:T(1,128)}', space=vmem, size = 0x12000, scoped, tag = 'internal scratch']
  #allocation2 [shape = 'f32[1,256]{1,0:T(1,128)}', space=vmem, size = 0x400, scoped, tag = 'scratch operand']
  #allocation3 [shape = 'f32[1,256]{1,0:T(1,128)}', space=vmem, size = 0x400, scoped, tag = 'scratch operand']
  %s0 = inlined_call_operand.vmem [shape: f32[2,21,256], index: 0, kind: input, shape index: {}]
  %s1 = inlined_call_operand.vmem [shape: s32[2,1,256], index: 1, kind: input, shape index: {}]
  %s2 = inlined_call_operand.hbm [shape: f32[1,1,1], index: 2, kind: output, shape index: {0}]
  %s3 = inlined_call_operand.hbm [shape: f32[1,1,1], index: 3, kind: output, shape index: {1}]
  %4 = xla_tuple %s2, %s3
  %s5 = sld [smem:[#allocation0]]
  $region57: #{_ce_loss_fused.1} parent=0
    _
  %s7 = ssub.s32 1, %s5
  %s8 = scalar_select 0, %s7, %s5
  $region1: #{_ce_loss_fused.1} parent=0
    #allocation4 [shape = 'u8[512]{0}', space=vmem, size = 0x400, scoped, tag = 'output window, operand 0, single buffered']
    #allocation5 [shape = 's32[2]{0}', space=sflag, size = 0x8, scoped, tag = 'scoped memory for _ce_loss_fused.1']
    #allocation6 [shape = 'u8[512]{0}', space=vmem, size = 0x400, scoped, tag = 'output window, operand 1, single buffered']
    #allocation7 [shape = 's32[1]{0}', space=sflag, size = 0x4, scoped, tag = 'scoped memory for _ce_loss_fused.1']
    %9 = vsyncpa [#allocation5], 0
    %10 = vsyncpa [#allocation7], 0
    loop: start=0, step=1, limit=4
    $region2: #{_ce_loss_fused.1} parent=1 // loop_pre_header
      _
    $region3: #{_ce_loss_fused.1} parent=1 // loop_header
      %s12 = sphi 0, %s16
      %p13 = scmp.ge.s32.totalorder %s12, 4
      %s19 = sphi 0, %s38
      %s20 = sphi 0, %s34
      %s21 = sphi 0, %s30
      %s22 = sphi 0, %s19
      %s23 = sphi 0, %s20
      %s24 = sphi 0, %s21
      %s25 = sphi 0, %s22
      %s26 = sphi 0, %s23
      %s27 = sphi 0, %s24
      %s45 = sphi 0, %s47
      %s48 = sphi 0, %s45
      %s49 = sphi 0, %s48
      %s65 = sphi 0, %s49
      %s75 = sphi 0, %s77
      %s78 = sphi 0, %s75
      %s79 = sphi 0, %s78
      %s95 = sphi 0, %s79
      %s101 = sphi 0, %s103
      %s104 = sphi 0, %s101
      %s105 = sphi 0, %s104
      %s121 = sphi 0, %s105
      %s127 = sphi 0, %s129
      %s130 = sphi 0, %s127
      %s131 = sphi 0, %s130
      %s147 = sphi 0, %s131
    $region4: #{_ce_loss_fused.1} parent=1 // loop_header_branch
      %15 = sbr.rel (%p13) target = $region8
    $region5: #{_ce_loss_fused.1} parent=1 // loop_body
      %s17 = ssub.s32 %s12, 1
      %s18 = ssub.s32 %s12, 2
      %s28 = sadd.s32 1, %s21
      %p29 = scmp.ge.s32.totalorder %s28, 1
      %s30 = scalar_select %p29, 0, %s28
      %s31 = sadd.s32 1, %s20
      %s32 = scalar_select %p29, %s31, %s20
      %p33 = scmp.ge.s32.totalorder %s32, 2
      %s34 = scalar_select %p33, 0, %s32
      %s35 = sadd.s32 1, %s19
      %s36 = scalar_select %p33, %s35, %s19
      %p37 = scmp.ge.s32.totalorder %s36, 1
      %s38 = scalar_select %p37, 0, %s36
      %s39 = sadd.s32 %s19, %s21
      %s40 = sadd.s32 %s38, %s30
      %s41 = ssub.s32 %s20, %s34
      %s42 = ssub.s32 %s39, %s40
      %s43 = sor.u32 %s41, %s42
      %p44 = scmp.eq.s32.totalorder %s43, 0
      %s46 = sadd.s32 %s45, 1
      %s47 = scalar_select %p44, %s45, %s46
      %p50 = pneg %p44
      %p51 = scmp.eq.s32.totalorder %s12, 1
      %p52 = por %p50, %p51
      %p53 = scmp.ne.s32.totalorder %s45, %s48
      %p54 = scmp.eq.s32.totalorder %s12, 0
      %p55 = por %p53, %p54
      %p56 = scmp.ne.s32.totalorder %s45, %s48
      %p57 = scmp.eq.s32.totalorder %s17, 1
      %p58 = por %p56, %p57
      %p59 = scmp.ne.s32.totalorder %s48, %s49
      %p60 = scmp.eq.s32.totalorder %s17, 0
      %p61 = por %p59, %p60
      %p62 = scmp.ne.s32.totalorder %s48, %s49
      %p63 = scmp.eq.s32.totalorder %s18, 1
      %p64 = por %p62, %p63
      %p66 = scmp.ne.s32.totalorder %s49, %s65
      %p67 = scmp.eq.s32.totalorder %s18, 0
      %p68 = por %p66, %p67
      %s69 = sadd.s32 %s19, %s21
      %s70 = sadd.s32 %s38, %s30
      %s71 = ssub.s32 %s20, %s34
      %s72 = ssub.s32 %s69, %s70
      %s73 = sor.u32 %s71, %s72
      %p74 = scmp.eq.s32.totalorder %s73, 0
      %s76 = sadd.s32 %s75, 1
      %s77 = scalar_select %p74, %s75, %s76
      %p80 = pneg %p74
      %p81 = scmp.eq.s32.totalorder %s12, 1
      %p82 = por %p80, %p81
      %p83 = scmp.ne.s32.totalorder %s75, %s78
      %p84 = scmp.eq.s32.totalorder %s12, 0
      %p85 = por %p83, %p84
      %p86 = scmp.ne.s32.totalorder %s75, %s78
      %p87 = scmp.eq.s32.totalorder %s17, 1
      %p88 = por %p86, %p87
      %p89 = scmp.ne.s32.totalorder %s78, %s79
      %p90 = scmp.eq.s32.totalorder %s17, 0
      %p91 = por %p89, %p90
      %p92 = scmp.ne.s32.totalorder %s78, %s79
      %p93 = scmp.eq.s32.totalorder %s18, 1
      %p94 = por %p92, %p93
      %p96 = scmp.ne.s32.totalorder %s79, %s95
      %p97 = scmp.eq.s32.totalorder %s18, 0
      %p98 = por %p96, %p97
      %s99 = ssub.s32 %s19, %s38
      %p100 = scmp.eq.s32.totalorder %s99, 0
      %s102 = sadd.s32 %s101, 1
      %s103 = scalar_select %p100, %s101, %s102
      %p106 = pneg %p100
      %p107 = scmp.eq.s32.totalorder %s12, 1
      %p108 = por %p106, %p107
      %p109 = scmp.ne.s32.totalorder %s101, %s104
      %p110 = scmp.eq.s32.totalorder %s12, 0
      %p111 = por %p109, %p110
      %p112 = scmp.ne.s32.totalorder %s101, %s104
      %p113 = scmp.eq.s32.totalorder %s17, 1
      %p114 = por %p112, %p113
      %p115 = scmp.ne.s32.totalorder %s104, %s105
      %p116 = scmp.eq.s32.totalorder %s17, 0
      %p117 = por %p115, %p116
      %p118 = scmp.ne.s32.totalorder %s104, %s105
      %p119 = scmp.eq.s32.totalorder %s18, 1
      %p120 = por %p118, %p119
      %p122 = scmp.ne.s32.totalorder %s105, %s121
      %p123 = scmp.eq.s32.totalorder %s18, 0
      %p124 = por %p122, %p123
      %s125 = ssub.s32 %s19, %s38
      %p126 = scmp.eq.s32.totalorder %s125, 0
      %s128 = sadd.s32 %s127, 1
      %s129 = scalar_select %p126, %s127, %s128
      %p132 = pneg %p126
      %p133 = scmp.eq.s32.totalorder %s12, 1
      %p134 = por %p132, %p133
      %p135 = scmp.ne.s32.totalorder %s127, %s130
      %p136 = scmp.eq.s32.totalorder %s12, 0
      %p137 = por %p135, %p136
      %p138 = scmp.ne.s32.totalorder %s127, %s130
      %p139 = scmp.eq.s32.totalorder %s17, 1
      %p140 = por %p138, %p139
      %p141 = scmp.ne.s32.totalorder %s130, %s131
      %p142 = scmp.eq.s32.totalorder %s17, 0
      %p143 = por %p141, %p142
      %p144 = scmp.ne.s32.totalorder %s130, %s131
      %p145 = scmp.eq.s32.totalorder %s18, 1
      %p146 = por %p144, %p145
      %p148 = scmp.ne.s32.totalorder %s131, %s147
      %p149 = scmp.eq.s32.totalorder %s18, 0
      %p150 = por %p148, %p149
      %p151 = scmp.le.s32.totalorder 1, %s12
      %p152 = scmp.lt.s32.totalorder %s12, 3
      %p153 = pnand %p151, %p152
      %p154 = pneg %p153
      // Predicated region
      $region9: #{_ce_loss_fused.1} parent=5 // pred_check
        _
      $region10: #{_ce_loss_fused.1} parent=5 // pred_check_branch
        %156 = sbr.rel (%p153) target = $region12
      $region11: #{_ce_loss_fused.1} parent=5 // pred_region
        %s157 = ssub.s32 %s12, 1
      $region12: #{_ce_loss_fused.1} parent=5 // pred_fallthru
        _
      %p158 = scmp.lt.s32.totalorder %s12, 2
      // Predicated region
      $region13: #{_ce_loss_fused.1} parent=5 // pred_check
        %p159 = pneg %p158
      $region14: #{_ce_loss_fused.1} parent=5 // pred_check_branch
        %161 = sbr.rel (%p159) target = $region16
      $region15: #{_ce_loss_fused.1} parent=5 // pred_region
        // Predicated region
        $region17: #{_ce_loss_fused.1} parent=15 // pred_check
          %p162 = pneg %p55
        $region18: #{_ce_loss_fused.1} parent=15 // pred_check_branch
          %164 = sbr.rel (%p162) target = $region20
        $region19: #{_ce_loss_fused.1} parent=15 // pred_region
          %s165 = sadd.s32 %s19, %s21
          %s166 = smul.u32 2, %s165
          %p167 = scmp.lt.s32.totalorder %s20, 1
          %s168 = scalar_select %p167, %s20, 1
          %p169 = scmp.lt.s32.totalorder %s166, 1
          %s170 = scalar_select %p169, %s166, 1
          %s171 = smul.addr %s168, 6
          %s172 = sadd.s32 %s170, %s171
          %s173 = smul.addr %s172, 8
          %s174 = scalar_lea.vmem %s0, %s173
          %s175 = sadd.s32 %s19, %s21
          %s176 = smul.u32 2, %s175
        $region20: #{_ce_loss_fused.1} parent=15 // pred_fallthru
          _
        // Predicated region
        $region21: #{_ce_loss_fused.1} parent=15 // pred_check
          %p177 = pneg %p85
        $region22: #{_ce_loss_fused.1} parent=15 // pred_check_branch
          %179 = sbr.rel (%p177) target = $region24
        $region23: #{_ce_loss_fused.1} parent=15 // pred_region
          %s180 = sadd.s32 %s19, %s21
          %s181 = smul.u32 2, %s180
          %p182 = scmp.lt.s32.totalorder %s20, 1
          %s183 = scalar_select %p182, %s20, 1
          %p184 = scmp.lt.s32.totalorder %s181, 1
          %s185 = scalar_select %p184, %s181, 1
          %s186 = smul.addr %s183, 2
          %s187 = sadd.s32 %s185, %s186
          %s188 = scalar_lea.vmem %s1, %s187
          %s189 = sadd.s32 %s19, %s21
          %s190 = smul.u32 2, %s189
        $region24: #{_ce_loss_fused.1} parent=15 // pred_fallthru
          _
      $region16: #{_ce_loss_fused.1} parent=5 // pred_fallthru
        _
      %p191 = scmp.le.s32.totalorder 1, %s12
      %p192 = scmp.lt.s32.totalorder %s12, 3
      %p193 = pnand %p191, %p192
      %p194 = pneg %p193
      // Predicated region
      $region25: #{_ce_loss_fused.1} parent=5 // pred_check
        _
      $region26: #{_ce_loss_fused.1} parent=5 // pred_check_branch
        %196 = sbr.rel (%p193) target = $region28
      $region27: #{_ce_loss_fused.1} parent=5 // pred_region
        %s197 = ssub.s32 %s12, 1
        %s198 = sadd.s32 %s22, %s24
        %s199 = smul.u32 2, %s198
        %p200 = scmp.lt.s32.totalorder %s23, 1
        %s201 = scalar_select %p200, %s23, 1
        %p202 = scmp.lt.s32.totalorder %s199, 1
        %s203 = scalar_select %p202, %s199, 1
        %s204 = smul.addr %s201, 6
        %s205 = sadd.s32 %s203, %s204
        %s206 = smul.addr %s205, 8
        %s207 = scalar_lea.vmem %s0, %s206
        %p208 = pneg %p61
        %p209 = pneg %p58
        %s210 = sadd.s32 %s22, %s24
        %s211 = smul.u32 2, %s210
        %p212 = scmp.lt.s32.totalorder %s23, 1
        %s213 = scalar_select %p212, %s23, 1
        %p214 = scmp.lt.s32.totalorder %s211, 1
        %s215 = scalar_select %p214, %s211, 1
        %s216 = smul.addr %s213, 2
        %s217 = sadd.s32 %s215, %s216
        %s218 = scalar_lea.vmem %s1, %s217
        %p219 = pneg %p91
        %p220 = pneg %p88
        %p221 = pneg %p117
        %p222 = pneg %p114
        %p223 = pneg %p143
        %p224 = pneg %p140
        %s225 = sadd.s32 %s22, %s24
        %s226 = smul.u32 2, %s225
        %p227 = scmp.lt.s32.totalorder %s23, 1
        %s228 = scalar_select %p227, %s23, 1
        %p229 = scmp.lt.s32.totalorder %s226, 1
        %s230 = scalar_select %p229, %s226, 1
        %s231 = smul.addr %s228, 6
        %s232 = sadd.s32 %s230, %s231
        %s233 = smul.addr %s232, 8
        %s234 = scalar_lea.vmem %s0, %s233
        %s235 = sadd.s32 %s22, %s24
        %s236 = smul.u32 2, %s235
        %s237 = sadd.s32 %s22, %s24
        %s238 = smul.u32 2, %s237
        %p239 = scmp.lt.s32.totalorder %s23, 1
        %s240 = scalar_select %p239, %s23, 1
        %p241 = scmp.lt.s32.totalorder %s238, 1
        %s242 = scalar_select %p241, %s238, 1
        %s243 = smul.addr %s240, 2
        %s244 = sadd.s32 %s242, %s243
        %s245 = scalar_lea.vmem %s1, %s244
        %s246 = sadd.s32 %s22, %s24
        %s247 = smul.u32 2, %s246
        %p248 = scmp.eq.s32.totalorder %s23, 0
        %p249 = scmp.eq.s32.totalorder %s24, 0
        %p250 = pnand %p248, %p249
        %p251 = pneg %p250
        // Predicated region
        $region29: #{_ce_loss_fused.1} parent=27 // pred_check
          _
        $region30: #{_ce_loss_fused.1} parent=27 // pred_check_branch
          %253 = sbr.rel (%p250) target = $region32
        $region31: #{_ce_loss_fused.1} parent=27 // pred_region
          %v254 = vlaneseq
          %vm255 = vcmp.ge.s32.totalorder %v254, 0
          %vm256 = vcmp.lt.s32.totalorder %v254, 256
          %vm257 = vmand %vm255, %vm256
          %258 = vst.msk [vmem:[#allocation2] sm:$0x3] %vm257, 0.0
          %259 = vst.msk [vmem:[#allocation3] sm:$0x3] %vm257, 0.0
        $region32: #{_ce_loss_fused.1} parent=27 // pred_fallthru
          _
        %s260 = sadd.s32 %s22, %s24
        %s261 = smul.u32 %s260, 256
        %v262 = vlaneseq
        %v263 = vand.u32 %v262, 127
        %v264 = vadd.s32 %v263, 128
        %v265 = vstv %s261
        %v266 = vadd.s32 %v265, %v263
        %v267 = vadd.s32 %v265, %v264
        %vm268 = vcmp.lt.s32.totalorder %v266, 256
        %vm269 = vcmp.lt.s32.totalorder %v267, 256
        %v270 = vld [vmem:[%s245] sm:$0x3]
        %vm271 = vcmp.ne.s32.totalorder %v270, 255
        %v272 = vsel %vm271, 1, 0
        %v273 = vlaneseq
        %v274 = vshrl.u32 %v273, 7
        %v275 = vsub.s32 0, %v274
        %v276 = vrot.slane %v272, %v275
        %v277 = vlaneseq
        %v278 = vshrl.u32 %v277, 7
        %v279 = vsub.s32 1, %v278
        %v280 = vrot.slane %v272, %v279
        %vm281 = vcmp.ne.s32.totalorder %v276, 0
        %vm282 = vcmp.ne.s32.totalorder %v280, 0
        %vm283 = vmand %vm268, %vm281
        %vm284 = vmand %vm269, %vm282
        %v285 = vlaneseq
        %v286 = vshrl.u32 %v285, 7
        %v287 = vadd.s32 %v286, 8
        %v288 = vadd.s32 %v286, 16
        %v289 = vlaneseq
        %v290 = vshrl.u32 %v289, 7
        %v291 = vsub.s32 0, %v290
        %v292 = vrot.slane %v270, %v291
        %v293 = vlaneseq
        %v294 = vshrl.u32 %v293, 7
        %v295 = vsub.s32 1, %v294
        %v296 = vrot.slane %v270, %v295
        %vm297 = vcmp.eq.s32.totalorder %v286, %v292
        %vm298 = vcmp.eq.s32.totalorder %v286, %v296
        %vm299 = vcmp.eq.s32.totalorder %v287, %v292
        %vm300 = vcmp.eq.s32.totalorder %v287, %v296
        %vm301 = vcmp.eq.s32.totalorder %v288, %v292
        %vm302 = vcmp.eq.s32.totalorder %v288, %v296
        %v303 = vld [vmem:[%s234] sm:$0xff]
        %v304 = vld [vmem:[%s234 + $0x8] sm:$0xff]
        %v305 = vld [vmem:[%s234 + $0x10] sm:$0xff]
        %v306 = vld [vmem:[%s234 + $0x18] sm:$0xff]
        %v307 = vld [vmem:[%s234 + $0x20] sm:$0x1f]
        %v308 = vld [vmem:[%s234 + $0x28] sm:$0x1f]
        %vm309 = vcmask 1044480
        %v310 = vsel %vm309, %v307, -inf
        %v311 = vmax.f32 %v303, %v310
        %v312 = vmax.f32 %v311, %v305
        %v313 = vrot.slane %v312, 4
        %v314 = vmax.f32 %v312, %v313
        %v315 = vrot.slane %v314, 2
        %v316 = vmax.f32 %v314, %v315
        %v317 = vrot.slane %v316, 1
        %v318 = vmax.f32 %v316, %v317
        %v319 = vsel %vm309, %v308, -inf
        %v320 = vmax.f32 %v304, %v319
        %v321 = vmax.f32 %v320, %v306
        %v322 = vrot.slane %v321, 4
        %v323 = vmax.f32 %v321, %v322
        %v324 = vrot.slane %v323, 2
        %v325 = vmax.f32 %v323, %v324
        %v326 = vrot.slane %v325, 1
        %v327 = vmax.f32 %v325, %v326
        %v328 = vsub.f32 %v303, %v318
        %v329 = vsub.f32 %v304, %v327
        %v330 = vsub.f32 %v305, %v318
        %v331 = vsub.f32 %v306, %v327
        %v332 = vsub.f32 %v307, %v318
        %v333 = vsub.f32 %v308, %v327
        %v334 = vmul.f32 %v328, 1.442695
        %v335 = vpow.pop %v334
        %v336 = vmul.f32 %v329, 1.442695
        %v337 = vpow.pop %v336
        %v338 = vmul.f32 %v330, 1.442695
        %v339 = vpow.pop %v338
        %v340 = vmul.f32 %v331, 1.442695
        %v341 = vpow.pop %v340
        %v342 = vmul.f32 %v332, 1.442695
        %v343 = vpow.pop %v342
        %v344 = vmul.f32 %v333, 1.442695
        %v345 = vpow.pop %v344
        %v346 = vadd.f32 %v335, %v339
        %v347 = vsel %vm309, %v343, 0.0
        %v348 = vadd.f32 %v346, %v347
        %v349 = vrot.slane %v348, 4
        %v350 = vadd.f32 %v348, %v349
        %v351 = vrot.slane %v350, 2
        %v352 = vadd.f32 %v350, %v351
        %v353 = vrot.slane %v352, 1
        %v354 = vadd.f32 %v352, %v353
        %v355 = vadd.f32 %v337, %v341
        %v356 = vsel %vm309, %v345, 0.0
        %v357 = vadd.f32 %v355, %v356
        %v358 = vrot.slane %v357, 4
        %v359 = vadd.f32 %v357, %v358
        %v360 = vrot.slane %v359, 2
        %v361 = vadd.f32 %v359, %v360
        %v362 = vrot.slane %v361, 1
        %v363 = vadd.f32 %v361, %v362
        %v364 = vlog2.pop %v354
        %v365 = vmul.f32 %v364, 0.6931472
        %v366 = vlog2.pop %v363
        %v367 = vmul.f32 %v366, 0.6931472
        %v368 = vadd.f32 %v365, %v318
        %v369 = vadd.f32 %v367, %v327
        %v370 = vsel %vm297, %v303, 0.0
        %v371 = vsel %vm298, %v304, 0.0
        %v372 = vsel %vm299, %v305, 0.0
        %v373 = vsel %vm300, %v306, 0.0
        %v374 = vsel %vm301, %v307, 0.0
        %v375 = vsel %vm302, %v308, 0.0
        %v376 = vadd.f32 %v370, %v372
        %v377 = vsel %vm309, %v374, 0.0
        %v378 = vadd.f32 %v376, %v377
        %v379 = vrot.slane %v378, 4
        %v380 = vadd.f32 %v378, %v379
        %v381 = vrot.slane %v380, 2
        %v382 = vadd.f32 %v380, %v381
        %v383 = vrot.slane %v382, 1
        %v384 = vadd.f32 %v382, %v383
        %v385 = vadd.f32 %v371, %v373
        %v386 = vsel %vm309, %v375, 0.0
        %v387 = vadd.f32 %v385, %v386
        %v388 = vrot.slane %v387, 4
        %v389 = vadd.f32 %v387, %v388
        %v390 = vrot.slane %v389, 2
        %v391 = vadd.f32 %v389, %v390
        %v392 = vrot.slane %v391, 1
        %v393 = vadd.f32 %v391, %v392
        %v394 = vsub.f32 %v368, %v384
        %v395 = vsub.f32 %v369, %v393
        %v396 = vadd.f32 %v394, 0.0
        %v397 = vadd.f32 %v395, 0.0
        %v398 = vld [vmem:[#allocation2] sm:$0x3]
        %v399 = vsel %vm283, %v396, 0.0
        %v400 = vsel %vm284, %v397, 0.0
        %v403 = vcombine.low %v399, %v400
        %v405 = vunpack.c.l.s4 1966171168
        %v406 = vunpack.c.0.s8 %v405
        %v407 = vlaneseq
        %v408 = vshrl.u32 %v407, 7
        %v409 = vsub.s32 %v406, %v408
        %v410 = vrot.slane %v403, %v409
        %v412 = vunpack.c.l.s4 1966171168
        %v413 = vunpack.c.0.s8 %v412
        %v414 = vlaneseq
        %v415 = vshrl.u32 %v414, 7
        %v416 = vsub.s32 %v413, %v415
        %v417 = vrot.slane %v410, %v416
        %v419 = vadd.f32 %v398, %v417
        %v420 = vlaneseq
        %vm421 = vcmp.ge.s32.totalorder %v420, 0
        %vm422 = vcmp.lt.s32.totalorder %v420, 256
        %vm423 = vmand %vm421, %vm422
        %424 = vst.msk [vmem:[#allocation2] sm:$0x3] %vm423, %v419
        %v425 = vld [vmem:[#allocation3] sm:$0x3]
        %v426 = vsel %vm283, 1, 0
        %v427 = vsel %vm284, 1, 0
        %v428 = vcvt.s32.f32 %v426
        %v429 = vcvt.s32.f32 %v427
        %v432 = vcombine.low %v428, %v429
        %v434 = vunpack.c.l.s4 1966171168
        %v435 = vunpack.c.0.s8 %v434
        %v436 = vlaneseq
        %v437 = vshrl.u32 %v436, 7
        %v438 = vsub.s32 %v435, %v437
        %v439 = vrot.slane %v432, %v438
        %v441 = vunpack.c.l.s4 1966171168
        %v442 = vunpack.c.0.s8 %v441
        %v443 = vlaneseq
        %v444 = vshrl.u32 %v443, 7
        %v445 = vsub.s32 %v442, %v444
        %v446 = vrot.slane %v439, %v445
        %v448 = vadd.f32 %v425, %v446
        %449 = vst.msk [vmem:[#allocation3] sm:$0x3] %vm423, %v448
        %p450 = scmp.eq.s32.totalorder %s23, 1
        %p451 = pnand %p450, %p249
        %p452 = pneg %p451
        // Predicated region
        $region33: #{_ce_loss_fused.1} parent=27 // pred_check
          _
        $region34: #{_ce_loss_fused.1} parent=27 // pred_check_branch
          %454 = sbr.rel (%p451) target = $region36
        $region35: #{_ce_loss_fused.1} parent=27 // pred_region
          %v455 = vld [vmem:[#allocation2] sm:$0x3]
          %v457 = vlaneseq
          %v458 = vshrl.u32 %v457, 7
          %v459 = vsub.s32 0, %v458
          %v460 = vrot.slane %v455, %v459
          %v461 = vlaneseq
          %v462 = vshrl.u32 %v461, 7
          %v463 = vsub.s32 1, %v462
          %v464 = vrot.slane %v455, %v463
          %vm467 = vcmask 1040384
          %v468 = vsel %vm467, %v460, 0.0
          %v469 = vsel %vm467, %v464, 0.0
          %v470 = vadd.f32 %v468, %v469
          %471 = vadd.xlane.f32.xlu0 %v470
          %v472 = vpop.xlane.xlu0 %471
          %vm473 = vcmask 0
          %474 = vst.msk [vmem:[#allocation4] sm:$0x1] %vm473, %v472
          %v475 = vld [vmem:[#allocation3] sm:$0x3]
          %v477 = vlaneseq
          %v478 = vshrl.u32 %v477, 7
          %v479 = vsub.s32 0, %v478
          %v480 = vrot.slane %v475, %v479
          %v481 = vlaneseq
          %v482 = vshrl.u32 %v481, 7
          %v483 = vsub.s32 1, %v482
          %v484 = vrot.slane %v475, %v483
          %v487 = vsel %vm467, %v480, 0.0
          %v488 = vsel %vm467, %v484, 0.0
          %v489 = vadd.f32 %v487, %v488
          %490 = vadd.xlane.f32.xlu0 %v489
          %v491 = vpop.xlane.xlu0 %490
          %492 = vst.msk [vmem:[#allocation6] sm:$0x1] %vm473, %v491
        $region36: #{_ce_loss_fused.1} parent=27 // pred_fallthru
          _
        // Predicated region
        $region37: #{_ce_loss_fused.1} parent=27 // pred_check
          %p493 = pneg %p114
        $region38: #{_ce_loss_fused.1} parent=27 // pred_check_branch
          %495 = sbr.rel (%p493) target = $region40
        $region39: #{_ce_loss_fused.1} parent=27 // pred_region
          %s497 = ssub.s32 16, 16
          %498 = vsyncadd [#allocation5], %s497
          %s499 = smul.addr %s22, 16
          %s500 = scalar_lea.hbm %s2, %s499
          %s502 = sshll.u32 [#allocation4], 4
          %s503 = int_to_ptr.vmem [resolvable:$true] %s502
          %505 = dma.vmem_to_hbm [thread:$0]  %s503, 16, %s500, [#allocation5]
        $region40: #{_ce_loss_fused.1} parent=27 // pred_fallthru
          _
        // Predicated region
        $region41: #{_ce_loss_fused.1} parent=27 // pred_check
          %p506 = pneg %p140
        $region42: #{_ce_loss_fused.1} parent=27 // pred_check_branch
          %508 = sbr.rel (%p506) target = $region44
        $region43: #{_ce_loss_fused.1} parent=27 // pred_region
          %s510 = ssub.s32 16, 16
          %511 = vsyncadd [#allocation7], %s510
          %s512 = smul.addr %s22, 16
          %s513 = scalar_lea.hbm %s3, %s512
          %s515 = sshll.u32 [#allocation6], 4
          %s516 = int_to_ptr.vmem [resolvable:$true] %s515
          %518 = dma.vmem_to_hbm [thread:$0]  %s516, 16, %s513, [#allocation7]
        $region44: #{_ce_loss_fused.1} parent=27 // pred_fallthru
          _
        // Predicated region
        $region45: #{_ce_loss_fused.1} parent=27 // pred_check
          %p519 = pneg %p114
        $region46: #{_ce_loss_fused.1} parent=27 // pred_check_branch
          %521 = sbr.rel (%p519) target = $region48
        $region47: #{_ce_loss_fused.1} parent=27 // pred_region
          %522 = dma.done [#allocation5], 16
        $region48: #{_ce_loss_fused.1} parent=27 // pred_fallthru
          _
        // Predicated region
        $region49: #{_ce_loss_fused.1} parent=27 // pred_check
          %p523 = pneg %p140
        $region50: #{_ce_loss_fused.1} parent=27 // pred_check_branch
          %525 = sbr.rel (%p523) target = $region52
        $region51: #{_ce_loss_fused.1} parent=27 // pred_region
          %526 = dma.done [#allocation7], 16
        $region52: #{_ce_loss_fused.1} parent=27 // pred_fallthru
          _
      $region28: #{_ce_loss_fused.1} parent=5 // pred_fallthru
        _
      %p527 = scmp.le.s32.totalorder 2, %s12
      // Predicated region
      $region53: #{_ce_loss_fused.1} parent=5 // pred_check
        %p528 = pneg %p527
      $region54: #{_ce_loss_fused.1} parent=5 // pred_check_branch
        %530 = sbr.rel (%p528) target = $region56
      $region55: #{_ce_loss_fused.1} parent=5 // pred_region
        %s531 = ssub.s32 %s12, 2
      $region56: #{_ce_loss_fused.1} parent=5 // pred_fallthru
        _
    $region6: #{_ce_loss_fused.1} parent=1 // loop_footer
      %s16 = sadd.s32 1, %s12
    $region7: #{_ce_loss_fused.1} parent=1 // loop_footer_branch
      %11 = sbr.rel target = $region3
    $region8: #{_ce_loss_fused.1} parent=1 // loop_exit
      _
    %532 = vsyncpa [#allocation5], 1
    %s533 = scalar_lea.sflag [#allocation5], 1
    %534 = vsyncpa %s533, 1
    %535 = vsyncpa [#allocation7], 1

</llo_original>
